<compile_context>
chip_gen: v6e
topology: v6e:2x2x1
jax: 0.10.0
libtpu: 0.0.40
codegen_flags: <defaults>
</compile_context>

<pallas_src>
import jax
import jax.numpy as jnp
from jax import lax
from jax.experimental import pallas as pl
from jax.experimental.pallas import tpu as pltpu

D = 768          # config.text_dim (fixed by the module's __init__)
EPS = 1e-12      # FusedLayerNorm eps


def _roundup(x, m):
    return ((x + m - 1) // m) * m


def embed_ln_kernel(ids_ref, tt_ref,      # (Ts, 1) int32 VMEM blocks
                    pos_ref,              # (Ts, D) positional rows for this block
                    w_ref,                # (V, D) word table, VMEM-resident
                    t_ref,                # (TYPE_ROWS, D) token-type rows (resident)
                    g_ref, b_ref,         # (1, D) LayerNorm gamma / beta
                    o_ref):               # (Ts, D) output block
    Ts = o_ref.shape[0]
    V = w_ref.shape[0]
    NT = t_ref.shape[0]

    ids = ids_ref[...]                    # (Ts, 1) int32
    tt = tt_ref[...]                      # (Ts, 1) int32

    # Vectorized word-embedding gather: one-hot (Ts, V) @ (V, D) on the MXU.
    onehot_w = (ids == lax.broadcasted_iota(jnp.int32, (Ts, V), 1)).astype(w_ref.dtype)
    x = jnp.dot(onehot_w, w_ref[...], preferred_element_type=jnp.float32)

    # Token-type addend: tiny one-hot (Ts, 8) @ (8, D).
    onehot_t = (tt == lax.broadcasted_iota(jnp.int32, (Ts, NT), 1)).astype(t_ref.dtype)
    x = x + jnp.dot(onehot_t, t_ref[...], preferred_element_type=jnp.float32)

    # Positional addend arrives as a pipelined BlockSpec slice -> one VPU add.
    x = x + pos_ref[...].astype(jnp.float32)

    # LayerNorm over the whole (Ts, D) block (f32 math).
    mean = jnp.mean(x, axis=-1, keepdims=True)
    xc = x - mean
    var = jnp.mean(xc * xc, axis=-1, keepdims=True)
    y = xc * lax.rsqrt(var + EPS)
    y = y * g_ref[...].astype(jnp.float32) + b_ref[...].astype(jnp.float32)

    # Dropout(0.3): identity in eval/inference mode.
    # TODO(synk): training-mode stochastic dropout would need pltpu.prng_* and
    # cannot bit-match torch's RNG; intentionally omitted.
    o_ref[...] = y.astype(o_ref.dtype)


def simple_text_encoder(input_ids, token_type_ids,
                        word_emb, pos_emb, type_emb, gamma, beta,
                        *, block_seq=256, num_token_types=2):
    """input_ids, token_type_ids: (B, S) int32.  Returns (B, S, D) float32."""
    B, S = input_ids.shape
    V, d = word_emb.shape
    P = pos_emb.shape[0]
    assert d == D, f"text_dim must be {D}, got {d}"
    if S > P:
        raise ValueError(f"sequence length {S} exceeds max position embeddings {P}")

    # Sequence tiling: Ts tokens of one batch row per grid step.
    S8 = _roundup(S, 8)
    Ts = min(_roundup(block_seq, 8), S8)
    S_pad = _roundup(S, Ts)
    n_sblk = S_pad // Ts

    ids = input_ids.astype(jnp.int32)
    tt = token_type_ids.astype(jnp.int32)
    if S_pad != S:
        ids = jnp.pad(ids, ((0, 0), (0, S_pad - S)))     # pad with id 0 (valid row)
        tt = jnp.pad(tt, ((0, 0), (0, S_pad - S)))
    ids3 = ids.reshape(B, S_pad, 1)                      # (Ts, 1) int32 blocks in-kernel
    tt3 = tt.reshape(B, S_pad, 1)

    # Positional rows actually used: arange(S), zero-padded to S_pad rows.
    pos_slab = pos_emb[:S]
    if S_pad != S:
        pos_slab = jnp.pad(pos_slab, ((0, S_pad - S), (0, 0)))

    # Token-type rows actually used (BertTokenizer emits ids in {0, 1});
    # padded to 8 rows for (8,128)-tile alignment.  Ids >= TYPE_ROWS contribute
    # zero (graceful) rather than reading stale VMEM.
    TYPE_ROWS = _roundup(max(num_token_types, 1), 8)
    if V >= TYPE_ROWS:
        type_slab = type_emb[:TYPE_ROWS]
    else:
        type_slab = jnp.pad(type_emb, ((0, TYPE_ROWS - V), (0, 0)))

    gamma2 = gamma.reshape(1, D)
    beta2 = beta.reshape(1, D)

    # VMEM budget: resident word table + small slabs + a few (Ts, D) blocks.
    itemsize = jnp.dtype(word_emb.dtype).itemsize
    resident = (V * D + TYPE_ROWS * D + 2 * D) * itemsize
    per_block = Ts * D * itemsize + Ts * D * 4 + 2 * Ts * 4
    onehot_tmp = Ts * max(V, 128) * 4
    vmem_limit = int(min(max(2 * resident + 4 * per_block + onehot_tmp + (16 << 20),
                             32 << 20),
                         100 << 20))

    out = pl.pallas_call(
        embed_ln_kernel,
        out_shape=jax.ShapeDtypeStruct((B, S_pad, D), jnp.float32),
        grid=(B, n_sblk),
        in_specs=[
            pl.BlockSpec((None, Ts, 1), lambda b, s: (b, s, 0)),        # input_ids
            pl.BlockSpec((None, Ts, 1), lambda b, s: (b, s, 0)),        # token_type_ids
            pl.BlockSpec((Ts, D), lambda b, s: (s, 0)),                 # pos rows (pipelined)
            pl.BlockSpec((V, D), lambda b, s: (0, 0)),                  # word table (resident)
            pl.BlockSpec((TYPE_ROWS, D), lambda b, s: (0, 0)),          # type rows (resident)
            pl.BlockSpec((1, D), lambda b, s: (0, 0)),                  # gamma
            pl.BlockSpec((1, D), lambda b, s: (0, 0)),                  # beta
        ],
        out_specs=pl.BlockSpec((None, Ts, D), lambda b, s: (b, s, 0)),
        compiler_params=pltpu.CompilerParams(
            dimension_semantics=("parallel", "parallel"),
            vmem_limit_bytes=vmem_limit,
        ),
    )(ids3, tt3, pos_slab, word_emb, type_slab, gamma2, beta2)

    return out[:, :S, :]


if __name__ == "__main__":
    # Small synthetic configuration (vocab / max-pos kept small; D fixed at 768).
    VOCAB = 64          # stands in for len(tokenizer)
    MAX_POS = 32        # config.simple_encoder_max_position_embeddings
    B, S = 2, 8

    key = jax.random.PRNGKey(0)
    k_w, k_p, k_t, k_ids, k_tt = jax.random.split(key, 5)

    word_emb = 0.02 * jax.random.normal(k_w, (VOCAB, D), dtype=jnp.float32)
    word_emb = word_emb.at[0].set(0.0)                      # padding_idx=0
    pos_emb = 0.02 * jax.random.normal(k_p, (MAX_POS, D), dtype=jnp.float32)
    type_emb = 0.02 * jax.random.normal(k_t, (VOCAB, D), dtype=jnp.float32)
    gamma = jnp.ones((D,), jnp.float32)                     # LayerNorm weight
    beta = jnp.zeros((D,), jnp.float32)                     # LayerNorm bias

    input_ids = jax.random.randint(k_ids, (B, S), 1, VOCAB, dtype=jnp.int32)
    token_type_ids = jax.random.randint(k_tt, (B, S), 0, 2, dtype=jnp.int32)

    out = simple_text_encoder(input_ids, token_type_ids,
                              word_emb, pos_emb, type_emb, gamma, beta)
    out = jax.block_until_ready(out)

    # Pure-JAX reference for correctness.
    we = word_emb[input_ids]
    pe = pos_emb[jnp.arange(S)][None, :, :]
    te = type_emb[token_type_ids]
    x = we + pe + te
    mean = x.mean(-1, keepdims=True)
    var = ((x - mean) ** 2).mean(-1, keepdims=True)
    ref = (x - mean) / jnp.sqrt(var + EPS) * gamma + beta

    assert out.shape == (B, S, D) and out.dtype == jnp.float32
    assert jnp.allclose(out, ref, atol=1e-4, rtol=1e-4), "mismatch vs reference"
    print("KERNEL_OK")
</pallas_src>

<mosaic_0001>
module attributes {stable_mosaic.version = 11 : i64} {
  func.func @embed_ln_kernel(%arg0: i32, %arg1: i32, %arg2: memref<1x8x1xi32, #tpu.memory_space<vmem>>, %arg3: memref<1x8x1xi32, #tpu.memory_space<vmem>>, %arg4: memref<8x768xf32, #tpu.memory_space<vmem>>, %arg5: memref<64x768xf32, #tpu.memory_space<vmem>>, %arg6: memref<8x768xf32, #tpu.memory_space<vmem>>, %arg7: memref<1x768xf32, #tpu.memory_space<vmem>>, %arg8: memref<1x768xf32, #tpu.memory_space<vmem>>, %arg9: memref<1x8x768xf32, #tpu.memory_space<vmem>>) attributes {dimension_semantics = [#tpu.dimension_semantics<parallel>, #tpu.dimension_semantics<parallel>], iteration_bounds = array<i64: 2, 1>, scalar_prefetch = 0 : i64, scratch_operands = 0 : i64, tpu.core_type = #tpu.core_type<tc>, window_params = [{transform_indices = @transform_0, window_bounds = array<i64: 1, 8, 1>}, {transform_indices = @transform_1, window_bounds = array<i64: 1, 8, 1>}, {transform_indices = @transform_2, window_bounds = array<i64: 8, 768>}, {pipeline_mode = #tpu.pipeline_mode<synchronous>, transform_indices = @transform_3, window_bounds = array<i64: 64, 768>}, {pipeline_mode = #tpu.pipeline_mode<synchronous>, transform_indices = @transform_4, window_bounds = array<i64: 8, 768>}, {pipeline_mode = #tpu.pipeline_mode<synchronous>, transform_indices = @transform_5, window_bounds = array<i64: 1, 768>}, {pipeline_mode = #tpu.pipeline_mode<synchronous>, transform_indices = @transform_6, window_bounds = array<i64: 1, 768>}, {transform_indices = @transform_7, window_bounds = array<i64: 1, 8, 768>}]} {
    %c0 = arith.constant 0 : index
    %c0_0 = arith.constant 0 : index
    %c0_1 = arith.constant 0 : index
    %0 = vector.load %arg2[%c0, %c0_0, %c0_1] : memref<1x8x1xi32, #tpu.memory_space<vmem>>, vector<1x8x1xi32>
    %1 = vector.shape_cast %0 : vector<1x8x1xi32> to vector<8x1xi32>
    %c0_2 = arith.constant 0 : index
    %c0_3 = arith.constant 0 : index
    %c0_4 = arith.constant 0 : index
    %2 = vector.load %arg3[%c0_2, %c0_3, %c0_4] : memref<1x8x1xi32, #tpu.memory_space<vmem>>, vector<1x8x1xi32>
    %3 = vector.shape_cast %2 : vector<1x8x1xi32> to vector<8x1xi32>
    %4 = tpu.iota {dimensions = array<i32: 1>} : vector<8x64xi32>
    %5 = vector.broadcast %1 : vector<8x1xi32> to vector<8x64xi32>
    %6 = arith.cmpi eq, %5, %4 : vector<8x64xi32>
    %7 = arith.extui %6 : vector<8x64xi1> to vector<8x64xi32>
    %8 = arith.sitofp %7 : vector<8x64xi32> to vector<8x64xf32>
    %c0_5 = arith.constant 0 : index
    %c0_6 = arith.constant 0 : index
    %9 = vector.load %arg5[%c0_5, %c0_6] : memref<64x768xf32, #tpu.memory_space<vmem>>, vector<64x768xf32>
    %cst = arith.constant dense<0.000000e+00> : vector<8x768xf32>
    %10 = tpu.matmul %8, %9, %cst {dimension_numbers = #tpu.dot_dimension_numbers<[1], [0], [0], [1], [0, 0, 1, 1], [], []>} : vector<8x64xf32>, vector<64x768xf32>, vector<8x768xf32> -> vector<8x768xf32>
    %11 = tpu.iota {dimensions = array<i32: 1>} : vector<8x8xi32>
    %12 = vector.broadcast %3 : vector<8x1xi32> to vector<8x8xi32>
    %13 = arith.cmpi eq, %12, %11 : vector<8x8xi32>
    %14 = arith.extui %13 : vector<8x8xi1> to vector<8x8xi32>
    %15 = arith.sitofp %14 : vector<8x8xi32> to vector<8x8xf32>
    %c0_7 = arith.constant 0 : index
    %c0_8 = arith.constant 0 : index
    %16 = vector.load %arg6[%c0_7, %c0_8] : memref<8x768xf32, #tpu.memory_space<vmem>>, vector<8x768xf32>
    %cst_9 = arith.constant dense<0.000000e+00> : vector<8x768xf32>
    %17 = tpu.matmul %15, %16, %cst_9 {dimension_numbers = #tpu.dot_dimension_numbers<[1], [0], [0], [1], [0, 0, 1, 1], [], []>} : vector<8x8xf32>, vector<8x768xf32>, vector<8x768xf32> -> vector<8x768xf32>
    %18 = arith.addf %10, %17 : vector<8x768xf32>
    %c0_10 = arith.constant 0 : index
    %c0_11 = arith.constant 0 : index
    %19 = vector.load %arg4[%c0_10, %c0_11] : memref<8x768xf32, #tpu.memory_space<vmem>>, vector<8x768xf32>
    %20 = arith.addf %18, %19 : vector<8x768xf32>
    %cst_12 = arith.constant dense<0.000000e+00> : vector<8xf32>
    %21 = vector.multi_reduction <add>, %20, %cst_12 [1] : vector<8x768xf32> to vector<8xf32>
    %22 = vector.shape_cast %21 : vector<8xf32> to vector<8x1xf32>
    %cst_13 = arith.constant 7.680000e+02 : f32
    %23 = vector.broadcast %cst_13 : f32 to vector<8x1xf32>
    %24 = arith.divf %22, %23 : vector<8x1xf32>
    %25 = vector.broadcast %24 : vector<8x1xf32> to vector<8x768xf32>
    %26 = arith.subf %20, %25 : vector<8x768xf32>
    %27 = arith.mulf %26, %26 : vector<8x768xf32>
    %cst_14 = arith.constant dense<0.000000e+00> : vector<8xf32>
    %28 = vector.multi_reduction <add>, %27, %cst_14 [1] : vector<8x768xf32> to vector<8xf32>
    %29 = vector.shape_cast %28 : vector<8xf32> to vector<8x1xf32>
    %cst_15 = arith.constant 7.680000e+02 : f32
    %30 = vector.broadcast %cst_15 : f32 to vector<8x1xf32>
    %31 = arith.divf %29, %30 : vector<8x1xf32>
    %cst_16 = arith.constant 9.99999996E-13 : f32
    %32 = vector.broadcast %cst_16 : f32 to vector<8x1xf32>
    %33 = arith.addf %31, %32 : vector<8x1xf32>
    %34 = math.rsqrt %33 : vector<8x1xf32>
    %35 = vector.broadcast %34 : vector<8x1xf32> to vector<8x768xf32>
    %36 = arith.mulf %26, %35 : vector<8x768xf32>
    %c0_17 = arith.constant 0 : index
    %c0_18 = arith.constant 0 : index
    %37 = vector.load %arg7[%c0_17, %c0_18] : memref<1x768xf32, #tpu.memory_space<vmem>>, vector<1x768xf32>
    %38 = vector.broadcast %37 : vector<1x768xf32> to vector<8x768xf32>
    %39 = arith.mulf %36, %38 : vector<8x768xf32>
    %c0_19 = arith.constant 0 : index
    %c0_20 = arith.constant 0 : index
    %40 = vector.load %arg8[%c0_19, %c0_20] : memref<1x768xf32, #tpu.memory_space<vmem>>, vector<1x768xf32>
    %41 = vector.broadcast %40 : vector<1x768xf32> to vector<8x768xf32>
    %42 = arith.addf %39, %41 : vector<8x768xf32>
    %c0_21 = arith.constant 0 : index
    %c0_22 = arith.constant 0 : index
    %c0_23 = arith.constant 0 : index
    %43 = vector.load %arg9[%c0_21, %c0_22, %c0_23] : memref<1x8x768xf32, #tpu.memory_space<vmem>>, vector<1x8x768xf32>
    %44 = vector.shape_cast %43 : vector<1x8x768xf32> to vector<8x768xf32>
    %45 = vector.shape_cast %42 : vector<8x768xf32> to vector<1x8x768xf32>
    tpu.vector_store %arg9[%c0_21, %c0_22, %c0_23], %45 {strides = array<i32>} : memref<1x8x768xf32, #tpu.memory_space<vmem>>, vector<1x8x768xf32>,
    return
  }
  func.func @transform_0(%arg0: i32, %arg1: i32) -> (i32, i32, i32) {
    %c0_i32 = arith.constant 0 : i32
    %c0_i32_0 = arith.constant 0 : i32
    return %arg0, %arg1, %c0_i32 : i32, i32, i32
  }
  func.func @transform_1(%arg0: i32, %arg1: i32) -> (i32, i32, i32) {
    %c0_i32 = arith.constant 0 : i32
    %c0_i32_0 = arith.constant 0 : i32
    return %arg0, %arg1, %c0_i32 : i32, i32, i32
  }
  func.func @transform_2(%arg0: i32, %arg1: i32) -> (i32, i32) {
    %c0_i32 = arith.constant 0 : i32
    %c0_i32_0 = arith.constant 0 : i32
    return %arg1, %c0_i32 : i32, i32
  }
  func.func @transform_3(%arg0: i32, %arg1: i32) -> (i32, i32) {
    %c0_i32 = arith.constant 0 : i32
    %c0_i32_0 = arith.constant 0 : i32
    %c0_i32_1 = arith.constant 0 : i32
    return %c0_i32, %c0_i32_0 : i32, i32
  }
  func.func @transform_4(%arg0: i32, %arg1: i32) -> (i32, i32) {
    %c0_i32 = arith.constant 0 : i32
    %c0_i32_0 = arith.constant 0 : i32
    %c0_i32_1 = arith.constant 0 : i32
    return %c0_i32, %c0_i32_0 : i32, i32
  }
  func.func @transform_5(%arg0: i32, %arg1: i32) -> (i32, i32) {
    %c0_i32 = arith.constant 0 : i32
    %c0_i32_0 = arith.constant 0 : i32
    %c0_i32_1 = arith.constant 0 : i32
    return %c0_i32, %c0_i32_0 : i32, i32
  }
  func.func @transform_6(%arg0: i32, %arg1: i32) -> (i32, i32) {
    %c0_i32 = arith.constant 0 : i32
    %c0_i32_0 = arith.constant 0 : i32
    %c0_i32_1 = arith.constant 0 : i32
    return %c0_i32, %c0_i32_0 : i32, i32
  }
  func.func @transform_7(%arg0: i32, %arg1: i32) -> (i32, i32, i32) {
    %c0_i32 = arith.constant 0 : i32
    %c0_i32_0 = arith.constant 0 : i32
    return %arg0, %arg1, %c0_i32 : i32, i32, i32
  }
}

</mosaic_0001>

<llo_original>
// kernel: tpu_custom_call.1
$region0: #{tpu_custom_call.1}
  #allocation0 [shape = 'u32[]', space=smem, size = 0x4, offset = 0x4, fixed_abs, tag = 'smem constant byte address 0x4 - core index']
  #allocation1 [shape = 'u32[144,128]{1,0:T(1,128)}', space=vmem, size = 0x12000, scoped, tag = 'internal scratch']
  %s0 = inlined_call_operand.vmem [shape: s32[2,8,1], index: 0, kind: input, shape index: {}]
  %s1 = inlined_call_operand.vmem [shape: s32[2,8,1], index: 1, kind: input, shape index: {}]
  %s2 = inlined_call_operand.hbm [shape: f32[8,768], index: 2, kind: input, shape index: {}]
  %s3 = inlined_call_operand.hbm [shape: f32[64,768], index: 3, kind: input, shape index: {}]
  %s4 = inlined_call_operand.hbm [shape: f32[8,768], index: 4, kind: input, shape index: {}]
  %s5 = inlined_call_operand.vmem [shape: f32[1,768], index: 5, kind: input, shape index: {}]
  %s6 = inlined_call_operand.vmem [shape: f32[1,768], index: 6, kind: input, shape index: {}]
  %s7 = inlined_call_operand.hbm [shape: f32[2,8,768], index: 7, kind: output, shape index: {}]
  %s8 = sld [smem:[#allocation0]]
  $region73: #{tpu_custom_call.1} parent=0
    _
  %s10 = ssub.s32 1, %s8
  %s11 = scalar_select 0, %s10, %s8
  $region1: #{tpu_custom_call.1} parent=0
    #allocation2 [shape = 'u8[24576]{0}', space=vmem, size = 0x6000, scoped, tag = 'input window, operand 2, single buffered']
    #allocation3 [shape = 's32[2]{0}', space=sflag, size = 0x8, scoped, tag = 'scoped memory for tpu_custom_call.1']
    #allocation4 [shape = 's32[2]{0}', space=sflag, size = 0x8, scoped, tag = 'scoped memory for tpu_custom_call.1']
    #allocation5 [shape = 'u8[196608]{0}', space=vmem, size = 0x30000, scoped, tag = 'input window, operand 3, single buffered']
    #allocation6 [shape = 's32[1]{0}', space=sflag, size = 0x4, scoped, tag = 'scoped memory for tpu_custom_call.1']
    #allocation7 [shape = 'u8[24576]{0}', space=vmem, size = 0x6000, scoped, tag = 'input window, operand 4, single buffered']
    #allocation8 [shape = 'u8[49152]{0}', space=vmem, size = 0xc000, scoped, tag = 'output window, operand 0']
    %12 = vsyncpa [#allocation3], 0
    %13 = vsyncpa [#allocation6], 0
    %14 = vsyncpa [#allocation4], 0
    %s15 = scalar_lea.sflag [#allocation4], 1
    %16 = vsyncpa %s15, 0
    loop: start=0, step=1, limit=4
    $region2: #{tpu_custom_call.1} parent=1 // loop_pre_header
      _
    $region3: #{tpu_custom_call.1} parent=1 // loop_header
      %s18 = sphi 0, %s22
      %p19 = scmp.ge.s32.totalorder %s18, 4
      %s25 = sphi 0, %s37
      %s26 = sphi 0, %s33
      %s27 = sphi 0, %s25
      %s28 = sphi 0, %s26
      %s29 = sphi 0, %s27
      %s30 = sphi 0, %s28
      %s42 = sphi 0, %s44
      %s45 = sphi 0, %s42
      %s46 = sphi 0, %s45
      %s62 = sphi 0, %s46
      %s70 = sphi 0, %s72
      %s73 = sphi 0, %s70
      %s74 = sphi 0, %s73
      %s90 = sphi 0, %s74
      %s96 = sphi 0, %s98
      %s99 = sphi 0, %s96
      %s100 = sphi 0, %s99
      %s116 = sphi 0, %s100
      %s120 = sphi 0, %s120
      %s122 = sphi 0, %s120
      %s123 = sphi 0, %s122
      %s137 = sphi 0, %s123
      %s141 = sphi 0, %s141
      %s143 = sphi 0, %s141
      %s144 = sphi 0, %s143
      %s158 = sphi 0, %s144
      %s162 = sphi 0, %s162
      %s164 = sphi 0, %s162
      %s165 = sphi 0, %s164
      %s179 = sphi 0, %s165
      %s183 = sphi 0, %s183
      %s185 = sphi 0, %s183
      %s186 = sphi 0, %s185
      %s200 = sphi 0, %s186
      %s208 = sphi 0, %s210
      %s211 = sphi 0, %s208
      %s212 = sphi 0, %s211
      %s228 = sphi 0, %s212
    $region4: #{tpu_custom_call.1} parent=1 // loop_header_branch
      %21 = sbr.rel (%p19) target = $region8
    $region5: #{tpu_custom_call.1} parent=1 // loop_body
      %s23 = ssub.s32 %s18, 1
      %s24 = ssub.s32 %s18, 2
      %s31 = sadd.s32 1, %s26
      %p32 = scmp.ge.s32.totalorder %s31, 1
      %s33 = scalar_select %p32, 0, %s31
      %s34 = sadd.s32 1, %s25
      %s35 = scalar_select %p32, %s34, %s25
      %p36 = scmp.ge.s32.totalorder %s35, 2
      %s37 = scalar_select %p36, 0, %s35
      %s38 = ssub.s32 %s25, %s37
      %s39 = ssub.s32 %s26, %s33
      %s40 = sor.u32 %s38, %s39
      %p41 = scmp.eq.s32.totalorder %s40, 0
      %s43 = sadd.s32 %s42, 1
      %s44 = scalar_select %p41, %s42, %s43
      %p47 = pneg %p41
      %p48 = scmp.eq.s32.totalorder %s18, 1
      %p49 = por %p47, %p48
      %p50 = scmp.ne.s32.totalorder %s42, %s45
      %p51 = scmp.eq.s32.totalorder %s18, 0
      %p52 = por %p50, %p51
      %p53 = scmp.ne.s32.totalorder %s42, %s45
      %p54 = scmp.eq.s32.totalorder %s23, 1
      %p55 = por %p53, %p54
      %p56 = scmp.ne.s32.totalorder %s45, %s46
      %p57 = scmp.eq.s32.totalorder %s23, 0
      %p58 = por %p56, %p57
      %p59 = scmp.ne.s32.totalorder %s45, %s46
      %p60 = scmp.eq.s32.totalorder %s24, 1
      %p61 = por %p59, %p60
      %p63 = scmp.ne.s32.totalorder %s46, %s62
      %p64 = scmp.eq.s32.totalorder %s24, 0
      %p65 = por %p63, %p64
      %s66 = ssub.s32 %s25, %s37
      %s67 = ssub.s32 %s26, %s33
      %s68 = sor.u32 %s66, %s67
      %p69 = scmp.eq.s32.totalorder %s68, 0
      %s71 = sadd.s32 %s70, 1
      %s72 = scalar_select %p69, %s70, %s71
      %p75 = pneg %p69
      %p76 = scmp.eq.s32.totalorder %s18, 1
      %p77 = por %p75, %p76
      %p78 = scmp.ne.s32.totalorder %s70, %s73
      %p79 = scmp.eq.s32.totalorder %s18, 0
      %p80 = por %p78, %p79
      %p81 = scmp.ne.s32.totalorder %s70, %s73
      %p82 = scmp.eq.s32.totalorder %s23, 1
      %p83 = por %p81, %p82
      %p84 = scmp.ne.s32.totalorder %s73, %s74
      %p85 = scmp.eq.s32.totalorder %s23, 0
      %p86 = por %p84, %p85
      %p87 = scmp.ne.s32.totalorder %s73, %s74
      %p88 = scmp.eq.s32.totalorder %s24, 1
      %p89 = por %p87, %p88
      %p91 = scmp.ne.s32.totalorder %s74, %s90
      %p92 = scmp.eq.s32.totalorder %s24, 0
      %p93 = por %p91, %p92
      %s94 = ssub.s32 %s26, %s33
      %p95 = scmp.eq.s32.totalorder %s94, 0
      %s97 = sadd.s32 %s96, 1
      %s98 = scalar_select %p95, %s96, %s97
      %p101 = pneg %p95
      %p102 = scmp.eq.s32.totalorder %s18, 1
      %p103 = por %p101, %p102
      %p104 = scmp.ne.s32.totalorder %s96, %s99
      %p105 = scmp.eq.s32.totalorder %s18, 0
      %p106 = por %p104, %p105
      %p107 = scmp.ne.s32.totalorder %s96, %s99
      %p108 = scmp.eq.s32.totalorder %s23, 1
      %p109 = por %p107, %p108
      %p110 = scmp.ne.s32.totalorder %s99, %s100
      %p111 = scmp.eq.s32.totalorder %s23, 0
      %p112 = por %p110, %p111
      %p113 = scmp.ne.s32.totalorder %s99, %s100
      %p114 = scmp.eq.s32.totalorder %s24, 1
      %p115 = por %p113, %p114
      %p117 = scmp.ne.s32.totalorder %s100, %s116
      %p118 = scmp.eq.s32.totalorder %s24, 0
      %p119 = por %p117, %p118
      %s121 = sadd.s32 %s120, 1
      %p124 = scmp.eq.s32.totalorder %s18, 1
      %p125 = scmp.ne.s32.totalorder %s120, %s122
      %p126 = scmp.eq.s32.totalorder %s18, 0
      %p127 = por %p125, %p126
      %p128 = scmp.ne.s32.totalorder %s120, %s122
      %p129 = scmp.eq.s32.totalorder %s23, 1
      %p130 = por %p128, %p129
      %p131 = scmp.ne.s32.totalorder %s122, %s123
      %p132 = scmp.eq.s32.totalorder %s23, 0
      %p133 = por %p131, %p132
      %p134 = scmp.ne.s32.totalorder %s122, %s123
      %p135 = scmp.eq.s32.totalorder %s24, 1
      %p136 = por %p134, %p135
      %p138 = scmp.ne.s32.totalorder %s123, %s137
      %p139 = scmp.eq.s32.totalorder %s24, 0
      %p140 = por %p138, %p139
      %s142 = sadd.s32 %s141, 1
      %p145 = scmp.eq.s32.totalorder %s18, 1
      %p146 = scmp.ne.s32.totalorder %s141, %s143
      %p147 = scmp.eq.s32.totalorder %s18, 0
      %p148 = por %p146, %p147
      %p149 = scmp.ne.s32.totalorder %s141, %s143
      %p150 = scmp.eq.s32.totalorder %s23, 1
      %p151 = por %p149, %p150
      %p152 = scmp.ne.s32.totalorder %s143, %s144
      %p153 = scmp.eq.s32.totalorder %s23, 0
      %p154 = por %p152, %p153
      %p155 = scmp.ne.s32.totalorder %s143, %s144
      %p156 = scmp.eq.s32.totalorder %s24, 1
      %p157 = por %p155, %p156
      %p159 = scmp.ne.s32.totalorder %s144, %s158
      %p160 = scmp.eq.s32.totalorder %s24, 0
      %p161 = por %p159, %p160
      %s163 = sadd.s32 %s162, 1
      %p166 = scmp.eq.s32.totalorder %s18, 1
      %p167 = scmp.ne.s32.totalorder %s162, %s164
      %p168 = scmp.eq.s32.totalorder %s18, 0
      %p169 = por %p167, %p168
      %p170 = scmp.ne.s32.totalorder %s162, %s164
      %p171 = scmp.eq.s32.totalorder %s23, 1
      %p172 = por %p170, %p171
      %p173 = scmp.ne.s32.totalorder %s164, %s165
      %p174 = scmp.eq.s32.totalorder %s23, 0
      %p175 = por %p173, %p174
      %p176 = scmp.ne.s32.totalorder %s164, %s165
      %p177 = scmp.eq.s32.totalorder %s24, 1
      %p178 = por %p176, %p177
      %p180 = scmp.ne.s32.totalorder %s165, %s179
      %p181 = scmp.eq.s32.totalorder %s24, 0
      %p182 = por %p180, %p181
      %s184 = sadd.s32 %s183, 1
      %p187 = scmp.eq.s32.totalorder %s18, 1
      %p188 = scmp.ne.s32.totalorder %s183, %s185
      %p189 = scmp.eq.s32.totalorder %s18, 0
      %p190 = por %p188, %p189
      %p191 = scmp.ne.s32.totalorder %s183, %s185
      %p192 = scmp.eq.s32.totalorder %s23, 1
      %p193 = por %p191, %p192
      %p194 = scmp.ne.s32.totalorder %s185, %s186
      %p195 = scmp.eq.s32.totalorder %s23, 0
      %p196 = por %p194, %p195
      %p197 = scmp.ne.s32.totalorder %s185, %s186
      %p198 = scmp.eq.s32.totalorder %s24, 1
      %p199 = por %p197, %p198
      %p201 = scmp.ne.s32.totalorder %s186, %s200
      %p202 = scmp.eq.s32.totalorder %s24, 0
      %p203 = por %p201, %p202
      %s204 = ssub.s32 %s25, %s37
      %s205 = ssub.s32 %s26, %s33
      %s206 = sor.u32 %s204, %s205
      %p207 = scmp.eq.s32.totalorder %s206, 0
      %s209 = sadd.s32 %s208, 1
      %s210 = scalar_select %p207, %s208, %s209
      %p213 = pneg %p207
      %p214 = scmp.eq.s32.totalorder %s18, 1
      %p215 = por %p213, %p214
      %p216 = scmp.ne.s32.totalorder %s208, %s211
      %p217 = scmp.eq.s32.totalorder %s18, 0
      %p218 = por %p216, %p217
      %p219 = scmp.ne.s32.totalorder %s208, %s211
      %p220 = scmp.eq.s32.totalorder %s23, 1
      %p221 = por %p219, %p220
      %p222 = scmp.ne.s32.totalorder %s211, %s212
      %p223 = scmp.eq.s32.totalorder %s23, 0
      %p224 = por %p222, %p223
      %p225 = scmp.ne.s32.totalorder %s211, %s212
      %p226 = scmp.eq.s32.totalorder %s24, 1
      %p227 = por %p225, %p226
      %p229 = scmp.ne.s32.totalorder %s212, %s228
      %p230 = scmp.eq.s32.totalorder %s24, 0
      %p231 = por %p229, %p230
      %p232 = scmp.le.s32.totalorder 1, %s18
      %p233 = scmp.lt.s32.totalorder %s18, 3
      %p234 = pnand %p232, %p233
      %p235 = pneg %p234
      // Predicated region
      $region9: #{tpu_custom_call.1} parent=5 // pred_check
        _
      $region10: #{tpu_custom_call.1} parent=5 // pred_check_branch
        %237 = sbr.rel (%p234) target = $region12
      $region11: #{tpu_custom_call.1} parent=5 // pred_region
        %s238 = ssub.s32 %s18, 1
        // Predicated region
        $region13: #{tpu_custom_call.1} parent=11 // pred_check
          %p239 = pneg %p112
        $region14: #{tpu_custom_call.1} parent=11 // pred_check_branch
          %241 = sbr.rel (%p239) target = $region16
        $region15: #{tpu_custom_call.1} parent=11 // pred_region
          %s243 = ssub.s32 768, 768
          %244 = vsyncadd [#allocation3], %s243
          %s245 = smul.addr %s28, 6
          %s246 = smul.addr %s245, 128
          %s247 = scalar_lea.hbm %s2, %s246
          %s249 = sshll.u32 [#allocation2], 4
          %s250 = int_to_ptr.vmem [resolvable:$true] %s249
          %252 = dma.hbm_to_vmem [thread:$0]  %s247, 768, %s250, [#allocation3]
        $region16: #{tpu_custom_call.1} parent=11 // pred_fallthru
          _
        // Predicated region
        $region17: #{tpu_custom_call.1} parent=11 // pred_check
          %p253 = pneg %p133
        $region18: #{tpu_custom_call.1} parent=11 // pred_check_branch
          %255 = sbr.rel (%p253) target = $region20
        $region19: #{tpu_custom_call.1} parent=11 // pred_region
          %s257 = ssub.s32 6144, 6144
          %258 = vsyncadd [#allocation6], %s257
          %s259 = sshll.u32 [#allocation5], 4
          %s260 = int_to_ptr.vmem [resolvable:$true] %s259
          %265 = dma.hbm_to_vmem [thread:$0]  %s3, 6144, %s260, [#allocation6], 768, 768, 48
        $region20: #{tpu_custom_call.1} parent=11 // pred_fallthru
          _
        // Predicated region
        $region21: #{tpu_custom_call.1} parent=11 // pred_check
          %p266 = pneg %p154
        $region22: #{tpu_custom_call.1} parent=11 // pred_check_branch
          %268 = sbr.rel (%p266) target = $region24
        $region23: #{tpu_custom_call.1} parent=11 // pred_region
          %s270 = ssub.s32 768, 768
          %271 = vsyncadd [#allocation6], %s270
          %s273 = sshll.u32 [#allocation7], 4
          %s274 = int_to_ptr.vmem [resolvable:$true] %s273
          %276 = dma.hbm_to_vmem [thread:$0]  %s4, 768, %s274, [#allocation6]
        $region24: #{tpu_custom_call.1} parent=11 // pred_fallthru
          _
        // Predicated region
        $region25: #{tpu_custom_call.1} parent=11 // pred_check
          %p277 = pneg %p175
        $region26: #{tpu_custom_call.1} parent=11 // pred_check_branch
          %279 = sbr.rel (%p277) target = $region28
        $region27: #{tpu_custom_call.1} parent=11 // pred_region
          _
        $region28: #{tpu_custom_call.1} parent=11 // pred_fallthru
          _
        // Predicated region
        $region29: #{tpu_custom_call.1} parent=11 // pred_check
          %p280 = pneg %p196
        $region30: #{tpu_custom_call.1} parent=11 // pred_check_branch
          %282 = sbr.rel (%p280) target = $region32
        $region31: #{tpu_custom_call.1} parent=11 // pred_region
          _
        $region32: #{tpu_custom_call.1} parent=11 // pred_fallthru
          _
      $region12: #{tpu_custom_call.1} parent=5 // pred_fallthru
        _
      %p283 = scmp.lt.s32.totalorder %s18, 2
      // Predicated region
      $region33: #{tpu_custom_call.1} parent=5 // pred_check
        %p284 = pneg %p283
      $region34: #{tpu_custom_call.1} parent=5 // pred_check_branch
        %286 = sbr.rel (%p284) target = $region36
      $region35: #{tpu_custom_call.1} parent=5 // pred_region
        // Predicated region
        $region37: #{tpu_custom_call.1} parent=35 // pred_check
          %p287 = pneg %p52
        $region38: #{tpu_custom_call.1} parent=35 // pred_check_branch
          %289 = sbr.rel (%p287) target = $region40
        $region39: #{tpu_custom_call.1} parent=35 // pred_region
          %p290 = scmp.lt.s32.totalorder %s25, 1
          %s291 = scalar_select %p290, %s25, 1
          %p292 = scmp.lt.s32.totalorder %s26, 0
          %s293 = scalar_select %p292, %s26, 0
          %s294 = sadd.s32 %s293, %s291
          %s295 = smul.addr %s294, 8
          %s296 = scalar_lea.vmem %s0, %s295
        $region40: #{tpu_custom_call.1} parent=35 // pred_fallthru
          _
        // Predicated region
        $region41: #{tpu_custom_call.1} parent=35 // pred_check
          %p297 = pneg %p80
        $region42: #{tpu_custom_call.1} parent=35 // pred_check_branch
          %299 = sbr.rel (%p297) target = $region44
        $region43: #{tpu_custom_call.1} parent=35 // pred_region
          %p300 = scmp.lt.s32.totalorder %s25, 1
          %s301 = scalar_select %p300, %s25, 1
          %p302 = scmp.lt.s32.totalorder %s26, 0
          %s303 = scalar_select %p302, %s26, 0
          %s304 = sadd.s32 %s303, %s301
          %s305 = smul.addr %s304, 8
          %s306 = scalar_lea.vmem %s1, %s305
        $region44: #{tpu_custom_call.1} parent=35 // pred_fallthru
          _
      $region36: #{tpu_custom_call.1} parent=5 // pred_fallthru
        _
      %p307 = scmp.le.s32.totalorder 1, %s18
      %p308 = scmp.lt.s32.totalorder %s18, 3
      %p309 = pnand %p307, %p308
      %p310 = pneg %p309
      // Predicated region
      $region45: #{tpu_custom_call.1} parent=5 // pred_check
        _
      $region46: #{tpu_custom_call.1} parent=5 // pred_check_branch
        %312 = sbr.rel (%p309) target = $region48
      $region47: #{tpu_custom_call.1} parent=5 // pred_region
        %s313 = ssub.s32 %s18, 1
        // Predicated region
        $region49: #{tpu_custom_call.1} parent=47 // pred_check
          %p314 = pneg %p112
        $region50: #{tpu_custom_call.1} parent=47 // pred_check_branch
          %316 = sbr.rel (%p314) target = $region52
        $region51: #{tpu_custom_call.1} parent=47 // pred_region
          %317 = dma.done [#allocation3], 768
        $region52: #{tpu_custom_call.1} parent=47 // pred_fallthru
          _
        // Predicated region
        $region53: #{tpu_custom_call.1} parent=47 // pred_check
          %p318 = pneg %p133
        $region54: #{tpu_custom_call.1} parent=47 // pred_check_branch
          %320 = sbr.rel (%p318) target = $region56
        $region55: #{tpu_custom_call.1} parent=47 // pred_region
          %321 = dma.done [#allocation6], 6144
        $region56: #{tpu_custom_call.1} parent=47 // pred_fallthru
          _
        // Predicated region
        $region57: #{tpu_custom_call.1} parent=47 // pred_check
          %p322 = pneg %p154
        $region58: #{tpu_custom_call.1} parent=47 // pred_check_branch
          %324 = sbr.rel (%p322) target = $region60
        $region59: #{tpu_custom_call.1} parent=47 // pred_region
          %325 = dma.done [#allocation6], 768
        $region60: #{tpu_custom_call.1} parent=47 // pred_fallthru
          _
        %p326 = scmp.lt.s32.totalorder %s27, 1
        %s327 = scalar_select %p326, %s27, 1
        %p328 = scmp.lt.s32.totalorder %s28, 0
        %s329 = scalar_select %p328, %s28, 0
        %s330 = sadd.s32 %s329, %s327
        %s331 = smul.addr %s330, 8
        %s332 = scalar_lea.vmem %s0, %s331
        %p333 = pneg %p58
        %p334 = pneg %p55
        %p335 = scmp.lt.s32.totalorder %s27, 1
        %s336 = scalar_select %p335, %s27, 1
        %p337 = scmp.lt.s32.totalorder %s28, 0
        %s338 = scalar_select %p337, %s28, 0
        %s339 = sadd.s32 %s338, %s336
        %s340 = smul.addr %s339, 8
        %s341 = scalar_lea.vmem %s1, %s340
        %p342 = pneg %p86
        %p343 = pneg %p83
        %p344 = pneg %p112
        %p345 = pneg %p109
        %p346 = pneg %p133
        %p347 = pneg %p130
        %p348 = pneg %p154
        %p349 = pneg %p151
        %p350 = pneg %p175
        %p351 = pneg %p172
        %p352 = pneg %p196
        %p353 = pneg %p193
        %p354 = pneg %p224
        %p355 = pneg %p221
        %s356 = sand.u32 %s211, 1
        %s357 = scalar_lea.sflag [#allocation4], %s356
        %s358 = sand.u32 %s211, 1
        %s359 = smul.addr %s358, 48
        %s360 = scalar_lea.vmem [#allocation8], %s359
        %p361 = scmp.lt.s32.totalorder %s27, 1
        %s362 = scalar_select %p361, %s27, 1
        %p363 = scmp.lt.s32.totalorder %s28, 0
        %s364 = scalar_select %p363, %s28, 0
        %s365 = sadd.s32 %s364, %s362
        %s366 = smul.addr %s365, 8
        %s367 = scalar_lea.vmem %s0, %s366
        %p368 = scmp.lt.s32.totalorder %s27, 1
        %s369 = scalar_select %p368, %s27, 1
        %p370 = scmp.lt.s32.totalorder %s28, 0
        %s371 = scalar_select %p370, %s28, 0
        %s372 = sadd.s32 %s371, %s369
        %s373 = smul.addr %s372, 8
        %s374 = scalar_lea.vmem %s1, %s373
        %v375 = vld [vmem:[%s367] sm:$0xff]
        %v376 = vld [vmem:[%s374] sm:$0xff]
        %v377 = vlaneseq
        %v378 = vand.u32 %v377, 127
        %379 = vset.pattern.permute.xlu0 0
        %380 = vperm.xlu0 %379, %v375
        %v381 = vpop.permute.xlu0 %380
        %vm382 = vcmp.eq.s32.totalorder %v381, %v378
        %v383 = vsel %vm382, 1, 0
        %v384 = vcvt.s32.f32 %v383
        %v385 = vld [vmem:[#allocation5] sm:$0xff]
        %v386 = vld [vmem:[#allocation5 + $0x8] sm:$0xff]
        %v387 = vld [vmem:[#allocation5 + $0x10] sm:$0xff]
        %v388 = vld [vmem:[#allocation5 + $0x18] sm:$0xff]
        %v389 = vld [vmem:[#allocation5 + $0x20] sm:$0xff]
        %v390 = vld [vmem:[#allocation5 + $0x28] sm:$0xff]
        %v391 = vld [vmem:[#allocation5 + $0x30] sm:$0xff]
        %v392 = vld [vmem:[#allocation5 + $0x38] sm:$0xff]
        %v393 = vld [vmem:[#allocation5 + $0x40] sm:$0xff]
        %v394 = vld [vmem:[#allocation5 + $0x48] sm:$0xff]
        %v395 = vld [vmem:[#allocation5 + $0x50] sm:$0xff]
        %v396 = vld [vmem:[#allocation5 + $0x58] sm:$0xff]
        %v397 = vld [vmem:[#allocation5 + $0x60] sm:$0xff]
        %v398 = vld [vmem:[#allocation5 + $0x68] sm:$0xff]
        %v399 = vld [vmem:[#allocation5 + $0x70] sm:$0xff]
        %v400 = vld [vmem:[#allocation5 + $0x78] sm:$0xff]
        %v401 = vld [vmem:[#allocation5 + $0x80] sm:$0xff]
        %v402 = vld [vmem:[#allocation5 + $0x88] sm:$0xff]
        %v403 = vld [vmem:[#allocation5 + $0x90] sm:$0xff]
        %v404 = vld [vmem:[#allocation5 + $0x98] sm:$0xff]
        %v405 = vld [vmem:[#allocation5 + $0xa0] sm:$0xff]
        %v406 = vld [vmem:[#allocation5 + $0xa8] sm:$0xff]
        %v407 = vld [vmem:[#allocation5 + $0xb0] sm:$0xff]
        %v408 = vld [vmem:[#allocation5 + $0xb8] sm:$0xff]
        %v409 = vld [vmem:[#allocation5 + $0xc0] sm:$0xff]
        %v410 = vld [vmem:[#allocation5 + $0xc8] sm:$0xff]
        %v411 = vld [vmem:[#allocation5 + $0xd0] sm:$0xff]
        %v412 = vld [vmem:[#allocation5 + $0xd8] sm:$0xff]
        %v413 = vld [vmem:[#allocation5 + $0xe0] sm:$0xff]
        %v414 = vld [vmem:[#allocation5 + $0xe8] sm:$0xff]
        %v415 = vld [vmem:[#allocation5 + $0xf0] sm:$0xff]
        %v416 = vld [vmem:[#allocation5 + $0xf8] sm:$0xff]
        %v417 = vld [vmem:[#allocation5 + $0x100] sm:$0xff]
        %v418 = vld [vmem:[#allocation5 + $0x108] sm:$0xff]
        %v419 = vld [vmem:[#allocation5 + $0x110] sm:$0xff]
        %v420 = vld [vmem:[#allocation5 + $0x118] sm:$0xff]
        %v421 = vld [vmem:[#allocation5 + $0x120] sm:$0xff]
        %v422 = vld [vmem:[#allocation5 + $0x128] sm:$0xff]
        %v423 = vld [vmem:[#allocation5 + $0x130] sm:$0xff]
        %v424 = vld [vmem:[#allocation5 + $0x138] sm:$0xff]
        %v425 = vld [vmem:[#allocation5 + $0x140] sm:$0xff]
        %v426 = vld [vmem:[#allocation5 + $0x148] sm:$0xff]
        %v427 = vld [vmem:[#allocation5 + $0x150] sm:$0xff]
        %v428 = vld [vmem:[#allocation5 + $0x158] sm:$0xff]
        %v429 = vld [vmem:[#allocation5 + $0x160] sm:$0xff]
        %v430 = vld [vmem:[#allocation5 + $0x168] sm:$0xff]
        %v431 = vld [vmem:[#allocation5 + $0x170] sm:$0xff]
        %v432 = vld [vmem:[#allocation5 + $0x178] sm:$0xff]
        %433 = vset.pattern.permute.xlu0 0
        %434 = vperm.xlu0 %433, %v376
        %v435 = vpop.permute.xlu0 %434
        %vm436 = vcmp.eq.s32.totalorder %v435, %v378
        %v437 = vsel %vm436, 1, 0
        %v438 = vcvt.s32.f32 %v437
        %v439 = vld [vmem:[#allocation7] sm:$0xff]
        %v440 = vld [vmem:[#allocation7 + $0x8] sm:$0xff]
        %v441 = vld [vmem:[#allocation7 + $0x10] sm:$0xff]
        %v442 = vld [vmem:[#allocation7 + $0x18] sm:$0xff]
        %v443 = vld [vmem:[#allocation7 + $0x20] sm:$0xff]
        %v444 = vld [vmem:[#allocation7 + $0x28] sm:$0xff]
        %vm445 = vcmask 64512
        %v447 = vsel %vm445, %v438, 0
        %449 = vmatprep.subr.mxu0 0.0
        %450 = vmatpush1.msra.mxu0 0.0
        %451 = vmatprep.subr.mxu0 0.0
        %452 = vmatpush1.msra.mxu0 0.0
        %453 = vmatprep.subr.mxu0 0.0
        %454 = vmatpush1.msra.mxu0 0.0
        %455 = vmatprep.subr.mxu0 0.0
        %456 = vmatpush1.msra.mxu0 0.0
        %457 = vmatprep.subr.mxu0 0.0
        %458 = vmatpush1.msra.mxu0 0.0
        %459 = vmatprep.subr.mxu0 0.0
        %460 = vmatpush1.msra.mxu0 0.0
        %461 = vmatprep.subr.mxu0 0.0
        %462 = vmatpush1.msra.mxu0 0.0
        %463 = vmatprep.subr.mxu0 0.0
        %464 = vmatpush1.msra.mxu0 0.0
        %465 = vmatprep.subr.mxu0 0.0
        %466 = vmatpush1.msra.mxu0 0.0
        %467 = vmatprep.subr.mxu0 0.0
        %468 = vmatpush1.msra.mxu0 0.0
        %469 = vmatprep.subr.mxu0 0.0
        %470 = vmatpush1.msra.mxu0 0.0
        %471 = vmatprep.subr.mxu0 0.0
        %472 = vmatpush1.msra.mxu0 0.0
        %473 = vmatprep.subr.mxu0 0.0
        %474 = vmatpush1.msra.mxu0 0.0
        %475 = vmatprep.subr.mxu0 0.0
        %476 = vmatpush1.msra.mxu0 0.0
        %477 = vmatprep.subr.mxu0 0.0
        %478 = vmatpush1.msra.mxu0 0.0
        %479 = vmatprep.subr.mxu0 %v440
        %480 = vmatpush1.msra.mxu0 %v439
        %481 = vmatprep.subr.mxu0 0.0
        %482 = vmatpush2.msra.mxu0 0.0
        %483 = vmatprep.subr.mxu0 0.0
        %484 = vmatpush2.msra.mxu0 0.0
        %485 = vmatprep.subr.mxu0 0.0
        %486 = vmatpush2.msra.mxu0 0.0
        %487 = vmatprep.subr.mxu0 0.0
        %488 = vmatpush2.msra.mxu0 0.0
        %489 = vmatprep.subr.mxu0 0.0
        %490 = vmatpush2.msra.mxu0 0.0
        %491 = vmatprep.subr.mxu0 0.0
        %492 = vmatpush2.msra.mxu0 0.0
        %493 = vmatprep.subr.mxu0 0.0
        %494 = vmatpush2.msra.mxu0 0.0
        %495 = vmatprep.subr.mxu0 0.0
        %496 = vmatpush2.msra.mxu0 0.0
        %497 = vmatprep.subr.mxu0 0.0
        %498 = vmatpush2.msra.mxu0 0.0
        %499 = vmatprep.subr.mxu0 0.0
        %500 = vmatpush2.msra.mxu0 0.0
        %501 = vmatprep.subr.mxu0 0.0
        %502 = vmatpush2.msra.mxu0 0.0
        %503 = vmatprep.subr.mxu0 0.0
        %504 = vmatpush2.msra.mxu0 0.0
        %505 = vmatprep.subr.mxu0 0.0
        %506 = vmatpush2.msra.mxu0 0.0
        %507 = vmatprep.subr.mxu0 0.0
        %508 = vmatpush2.msra.mxu0 0.0
        %509 = vmatprep.subr.mxu0 0.0
        %510 = vmatpush2.msra.mxu0 0.0
        %511 = vmatprep.subr.mxu0 0.0
        %512 = vmatpush2.msra.mxu0 0.0
        %513 = vmatprep.mubr.f32.mxu0 0.0
        %514 = vmatmul.mubr.f32.gmra.mxu0 %v447
        %v515 = vpop.f32.mrf.mxu0
        %v516 = vadd.f32 0.0, %v515
        %v517 = vpop.f32.mrf.mxu0
        %v518 = vadd.f32 0.0, %v517
        %519 = vdwg.mxu0
        %520 = vmatprep.subr.mxu0 0.0
        %521 = vmatpush1.msra.mxu0 0.0
        %522 = vmatprep.subr.mxu0 0.0
        %523 = vmatpush1.msra.mxu0 0.0
        %524 = vmatprep.subr.mxu0 0.0
        %525 = vmatpush1.msra.mxu0 0.0
        %526 = vmatprep.subr.mxu0 0.0
        %527 = vmatpush1.msra.mxu0 0.0
        %528 = vmatprep.subr.mxu0 0.0
        %529 = vmatpush1.msra.mxu0 0.0
        %530 = vmatprep.subr.mxu0 0.0
        %531 = vmatpush1.msra.mxu0 0.0
        %532 = vmatprep.subr.mxu0 0.0
        %533 = vmatpush1.msra.mxu0 0.0
        %534 = vmatprep.subr.mxu0 0.0
        %535 = vmatpush1.msra.mxu0 0.0
        %536 = vmatprep.subr.mxu0 0.0
        %537 = vmatpush1.msra.mxu0 0.0
        %538 = vmatprep.subr.mxu0 0.0
        %539 = vmatpush1.msra.mxu0 0.0
        %540 = vmatprep.subr.mxu0 0.0
        %541 = vmatpush1.msra.mxu0 0.0
        %542 = vmatprep.subr.mxu0 0.0
        %543 = vmatpush1.msra.mxu0 0.0
        %544 = vmatprep.subr.mxu0 0.0
        %545 = vmatpush1.msra.mxu0 0.0
        %546 = vmatprep.subr.mxu0 0.0
        %547 = vmatpush1.msra.mxu0 0.0
        %548 = vmatprep.subr.mxu0 0.0
        %549 = vmatpush1.msra.mxu0 0.0
        %550 = vmatprep.subr.mxu0 %v442
        %551 = vmatpush1.msra.mxu0 %v441
        %552 = vmatprep.subr.mxu0 0.0
        %553 = vmatpush2.msra.mxu0 0.0
        %554 = vmatprep.subr.mxu0 0.0
        %555 = vmatpush2.msra.mxu0 0.0
        %556 = vmatprep.subr.mxu0 0.0
        %557 = vmatpush2.msra.mxu0 0.0
        %558 = vmatprep.subr.mxu0 0.0
        %559 = vmatpush2.msra.mxu0 0.0
        %560 = vmatprep.subr.mxu0 0.0
        %561 = vmatpush2.msra.mxu0 0.0
        %562 = vmatprep.subr.mxu0 0.0
        %563 = vmatpush2.msra.mxu0 0.0
        %564 = vmatprep.subr.mxu0 0.0
        %565 = vmatpush2.msra.mxu0 0.0
        %566 = vmatprep.subr.mxu0 0.0
        %567 = vmatpush2.msra.mxu0 0.0
        %568 = vmatprep.subr.mxu0 0.0
        %569 = vmatpush2.msra.mxu0 0.0
        %570 = vmatprep.subr.mxu0 0.0
        %571 = vmatpush2.msra.mxu0 0.0
        %572 = vmatprep.subr.mxu0 0.0
        %573 = vmatpush2.msra.mxu0 0.0
        %574 = vmatprep.subr.mxu0 0.0
        %575 = vmatpush2.msra.mxu0 0.0
        %576 = vmatprep.subr.mxu0 0.0
        %577 = vmatpush2.msra.mxu0 0.0
        %578 = vmatprep.subr.mxu0 0.0
        %579 = vmatpush2.msra.mxu0 0.0
        %580 = vmatprep.subr.mxu0 0.0
        %581 = vmatpush2.msra.mxu0 0.0
        %582 = vmatprep.subr.mxu0 0.0
        %583 = vmatpush2.msra.mxu0 0.0
        %584 = vmatprep.mubr.f32.mxu0 0.0
        %585 = vmatmul.mubr.f32.gmra.mxu0 %v447
        %v586 = vpop.f32.mrf.mxu0
        %v587 = vadd.f32 0.0, %v586
        %v588 = vpop.f32.mrf.mxu0
        %v589 = vadd.f32 0.0, %v588
        %590 = vdwg.mxu0
        %591 = vmatprep.subr.mxu0 0.0
        %592 = vmatpush1.msra.mxu0 0.0
        %593 = vmatprep.subr.mxu0 0.0
        %594 = vmatpush1.msra.mxu0 0.0
        %595 = vmatprep.subr.mxu0 0.0
        %596 = vmatpush1.msra.mxu0 0.0
        %597 = vmatprep.subr.mxu0 0.0
        %598 = vmatpush1.msra.mxu0 0.0
        %599 = vmatprep.subr.mxu0 0.0
        %600 = vmatpush1.msra.mxu0 0.0
        %601 = vmatprep.subr.mxu0 0.0
        %602 = vmatpush1.msra.mxu0 0.0
        %603 = vmatprep.subr.mxu0 0.0
        %604 = vmatpush1.msra.mxu0 0.0
        %605 = vmatprep.subr.mxu0 0.0
        %606 = vmatpush1.msra.mxu0 0.0
        %607 = vmatprep.subr.mxu0 0.0
        %608 = vmatpush1.msra.mxu0 0.0
        %609 = vmatprep.subr.mxu0 0.0
        %610 = vmatpush1.msra.mxu0 0.0
        %611 = vmatprep.subr.mxu0 0.0
        %612 = vmatpush1.msra.mxu0 0.0
        %613 = vmatprep.subr.mxu0 0.0
        %614 = vmatpush1.msra.mxu0 0.0
        %615 = vmatprep.subr.mxu0 0.0
        %616 = vmatpush1.msra.mxu0 0.0
        %617 = vmatprep.subr.mxu0 0.0
        %618 = vmatpush1.msra.mxu0 0.0
        %619 = vmatprep.subr.mxu0 0.0
        %620 = vmatpush1.msra.mxu0 0.0
        %621 = vmatprep.subr.mxu0 %v444
        %622 = vmatpush1.msra.mxu0 %v443
        %623 = vmatprep.subr.mxu0 0.0
        %624 = vmatpush2.msra.mxu0 0.0
        %625 = vmatprep.subr.mxu0 0.0
        %626 = vmatpush2.msra.mxu0 0.0
        %627 = vmatprep.subr.mxu0 0.0
        %628 = vmatpush2.msra.mxu0 0.0
        %629 = vmatprep.subr.mxu0 0.0
        %630 = vmatpush2.msra.mxu0 0.0
        %631 = vmatprep.subr.mxu0 0.0
        %632 = vmatpush2.msra.mxu0 0.0
        %633 = vmatprep.subr.mxu0 0.0
        %634 = vmatpush2.msra.mxu0 0.0
        %635 = vmatprep.subr.mxu0 0.0
        %636 = vmatpush2.msra.mxu0 0.0
        %637 = vmatprep.subr.mxu0 0.0
        %638 = vmatpush2.msra.mxu0 0.0
        %639 = vmatprep.subr.mxu0 0.0
        %640 = vmatpush2.msra.mxu0 0.0
        %641 = vmatprep.subr.mxu0 0.0
        %642 = vmatpush2.msra.mxu0 0.0
        %643 = vmatprep.subr.mxu0 0.0
        %644 = vmatpush2.msra.mxu0 0.0
        %645 = vmatprep.subr.mxu0 0.0
        %646 = vmatpush2.msra.mxu0 0.0
        %647 = vmatprep.subr.mxu0 0.0
        %648 = vmatpush2.msra.mxu0 0.0
        %649 = vmatprep.subr.mxu0 0.0
        %650 = vmatpush2.msra.mxu0 0.0
        %651 = vmatprep.subr.mxu0 0.0
        %652 = vmatpush2.msra.mxu0 0.0
        %653 = vmatprep.subr.mxu0 0.0
        %654 = vmatpush2.msra.mxu0 0.0
        %655 = vmatprep.mubr.f32.mxu0 0.0
        %656 = vmatmul.mubr.f32.gmra.mxu0 %v447
        %v657 = vpop.f32.mrf.mxu0
        %v658 = vadd.f32 0.0, %v657
        %v659 = vpop.f32.mrf.mxu0
        %v660 = vadd.f32 0.0, %v659
        %661 = vdwg.mxu0
        %vm662 = vcmask 523264
        %v664 = vsel %vm662, %v384, 0
        %666 = vmatprep.subr.mxu0 0.0
        %667 = vmatpush1.msra.mxu0 0.0
        %668 = vmatprep.subr.mxu0 0.0
        %669 = vmatpush1.msra.mxu0 0.0
        %670 = vmatprep.subr.mxu0 0.0
        %671 = vmatpush1.msra.mxu0 0.0
        %672 = vmatprep.subr.mxu0 0.0
        %673 = vmatpush1.msra.mxu0 0.0
        %674 = vmatprep.subr.mxu0 0.0
        %675 = vmatpush1.msra.mxu0 0.0
        %676 = vmatprep.subr.mxu0 0.0
        %677 = vmatpush1.msra.mxu0 0.0
        %678 = vmatprep.subr.mxu0 0.0
        %679 = vmatpush1.msra.mxu0 0.0
        %680 = vmatprep.subr.mxu0 0.0
        %681 = vmatpush1.msra.mxu0 0.0
        %682 = vmatprep.subr.mxu0 %v428
        %683 = vmatpush1.msra.mxu0 %v427
        %684 = vmatprep.subr.mxu0 %v422
        %685 = vmatpush1.msra.mxu0 %v421
        %686 = vmatprep.subr.mxu0 %v416
        %687 = vmatpush1.msra.mxu0 %v415
        %688 = vmatprep.subr.mxu0 %v410
        %689 = vmatpush1.msra.mxu0 %v409
        %690 = vmatprep.subr.mxu0 %v404
        %691 = vmatpush1.msra.mxu0 %v403
        %692 = vmatprep.subr.mxu0 %v398
        %693 = vmatpush1.msra.mxu0 %v397
        %694 = vmatprep.subr.mxu0 %v392
        %695 = vmatpush1.msra.mxu0 %v391
        %696 = vmatprep.subr.mxu0 %v386
        %697 = vmatpush1.msra.mxu0 %v385
        %698 = vmatprep.subr.mxu0 0.0
        %699 = vmatpush2.msra.mxu0 0.0
        %700 = vmatprep.subr.mxu0 0.0
        %701 = vmatpush2.msra.mxu0 0.0
        %702 = vmatprep.subr.mxu0 0.0
        %703 = vmatpush2.msra.mxu0 0.0
        %704 = vmatprep.subr.mxu0 0.0
        %705 = vmatpush2.msra.mxu0 0.0
        %706 = vmatprep.subr.mxu0 0.0
        %707 = vmatpush2.msra.mxu0 0.0
        %708 = vmatprep.subr.mxu0 0.0
        %709 = vmatpush2.msra.mxu0 0.0
        %710 = vmatprep.subr.mxu0 0.0
        %711 = vmatpush2.msra.mxu0 0.0
        %712 = vmatprep.subr.mxu0 0.0
        %713 = vmatpush2.msra.mxu0 0.0
        %714 = vmatprep.subr.mxu0 0.0
        %715 = vmatpush2.msra.mxu0 0.0
        %716 = vmatprep.subr.mxu0 0.0
        %717 = vmatpush2.msra.mxu0 0.0
        %718 = vmatprep.subr.mxu0 0.0
        %719 = vmatpush2.msra.mxu0 0.0
        %720 = vmatprep.subr.mxu0 0.0
        %721 = vmatpush2.msra.mxu0 0.0
        %722 = vmatprep.subr.mxu0 0.0
        %723 = vmatpush2.msra.mxu0 0.0
        %724 = vmatprep.subr.mxu0 0.0
        %725 = vmatpush2.msra.mxu0 0.0
        %726 = vmatprep.subr.mxu0 0.0
        %727 = vmatpush2.msra.mxu0 0.0
        %728 = vmatprep.subr.mxu0 0.0
        %729 = vmatpush2.msra.mxu0 0.0
        %730 = vmatprep.mubr.f32.mxu0 0.0
        %731 = vmatmul.mubr.f32.gmra.mxu0 %v664
        %v732 = vpop.f32.mrf.mxu0
        %v733 = vadd.f32 %v516, %v732
        %v734 = vpop.f32.mrf.mxu0
        %v735 = vadd.f32 %v518, %v734
        %736 = vdwg.mxu0
        %737 = vmatprep.subr.mxu0 0.0
        %738 = vmatpush1.msra.mxu0 0.0
        %739 = vmatprep.subr.mxu0 0.0
        %740 = vmatpush1.msra.mxu0 0.0
        %741 = vmatprep.subr.mxu0 0.0
        %742 = vmatpush1.msra.mxu0 0.0
        %743 = vmatprep.subr.mxu0 0.0
        %744 = vmatpush1.msra.mxu0 0.0
        %745 = vmatprep.subr.mxu0 0.0
        %746 = vmatpush1.msra.mxu0 0.0
        %747 = vmatprep.subr.mxu0 0.0
        %748 = vmatpush1.msra.mxu0 0.0
        %749 = vmatprep.subr.mxu0 0.0
        %750 = vmatpush1.msra.mxu0 0.0
        %751 = vmatprep.subr.mxu0 0.0
        %752 = vmatpush1.msra.mxu0 0.0
        %753 = vmatprep.subr.mxu0 %v430
        %754 = vmatpush1.msra.mxu0 %v429
        %755 = vmatprep.subr.mxu0 %v424
        %756 = vmatpush1.msra.mxu0 %v423
        %757 = vmatprep.subr.mxu0 %v418
        %758 = vmatpush1.msra.mxu0 %v417
        %759 = vmatprep.subr.mxu0 %v412
        %760 = vmatpush1.msra.mxu0 %v411
        %761 = vmatprep.subr.mxu0 %v406
        %762 = vmatpush1.msra.mxu0 %v405
        %763 = vmatprep.subr.mxu0 %v400
        %764 = vmatpush1.msra.mxu0 %v399
        %765 = vmatprep.subr.mxu0 %v394
        %766 = vmatpush1.msra.mxu0 %v393
        %767 = vmatprep.subr.mxu0 %v388
        %768 = vmatpush1.msra.mxu0 %v387
        %769 = vmatprep.subr.mxu0 0.0
        %770 = vmatpush2.msra.mxu0 0.0
        %771 = vmatprep.subr.mxu0 0.0
        %772 = vmatpush2.msra.mxu0 0.0
        %773 = vmatprep.subr.mxu0 0.0
        %774 = vmatpush2.msra.mxu0 0.0
        %775 = vmatprep.subr.mxu0 0.0
        %776 = vmatpush2.msra.mxu0 0.0
        %777 = vmatprep.subr.mxu0 0.0
        %778 = vmatpush2.msra.mxu0 0.0
        %779 = vmatprep.subr.mxu0 0.0
        %780 = vmatpush2.msra.mxu0 0.0
        %781 = vmatprep.subr.mxu0 0.0
        %782 = vmatpush2.msra.mxu0 0.0
        %783 = vmatprep.subr.mxu0 0.0
        %784 = vmatpush2.msra.mxu0 0.0
        %785 = vmatprep.subr.mxu0 0.0
        %786 = vmatpush2.msra.mxu0 0.0
        %787 = vmatprep.subr.mxu0 0.0
        %788 = vmatpush2.msra.mxu0 0.0
        %789 = vmatprep.subr.mxu0 0.0
        %790 = vmatpush2.msra.mxu0 0.0
        %791 = vmatprep.subr.mxu0 0.0
        %792 = vmatpush2.msra.mxu0 0.0
        %793 = vmatprep.subr.mxu0 0.0
        %794 = vmatpush2.msra.mxu0 0.0
        %795 = vmatprep.subr.mxu0 0.0
        %796 = vmatpush2.msra.mxu0 0.0
        %797 = vmatprep.subr.mxu0 0.0
        %798 = vmatpush2.msra.mxu0 0.0
        %799 = vmatprep.subr.mxu0 0.0
        %800 = vmatpush2.msra.mxu0 0.0
        %801 = vmatprep.mubr.f32.mxu0 0.0
        %802 = vmatmul.mubr.f32.gmra.mxu0 %v664
        %v803 = vpop.f32.mrf.mxu0
        %v804 = vadd.f32 %v587, %v803
        %v805 = vpop.f32.mrf.mxu0
        %v806 = vadd.f32 %v589, %v805
        %807 = vdwg.mxu0
        %808 = vmatprep.subr.mxu0 0.0
        %809 = vmatpush1.msra.mxu0 0.0
        %810 = vmatprep.subr.mxu0 0.0
        %811 = vmatpush1.msra.mxu0 0.0
        %812 = vmatprep.subr.mxu0 0.0
        %813 = vmatpush1.msra.mxu0 0.0
        %814 = vmatprep.subr.mxu0 0.0
        %815 = vmatpush1.msra.mxu0 0.0
        %816 = vmatprep.subr.mxu0 0.0
        %817 = vmatpush1.msra.mxu0 0.0
        %818 = vmatprep.subr.mxu0 0.0
        %819 = vmatpush1.msra.mxu0 0.0
        %820 = vmatprep.subr.mxu0 0.0
        %821 = vmatpush1.msra.mxu0 0.0
        %822 = vmatprep.subr.mxu0 0.0
        %823 = vmatpush1.msra.mxu0 0.0
        %824 = vmatprep.subr.mxu0 %v432
        %825 = vmatpush1.msra.mxu0 %v431
        %826 = vmatprep.subr.mxu0 %v426
        %827 = vmatpush1.msra.mxu0 %v425
        %828 = vmatprep.subr.mxu0 %v420
        %829 = vmatpush1.msra.mxu0 %v419
        %830 = vmatprep.subr.mxu0 %v414
        %831 = vmatpush1.msra.mxu0 %v413
        %832 = vmatprep.subr.mxu0 %v408
        %833 = vmatpush1.msra.mxu0 %v407
        %834 = vmatprep.subr.mxu0 %v402
        %835 = vmatpush1.msra.mxu0 %v401
        %836 = vmatprep.subr.mxu0 %v396
        %837 = vmatpush1.msra.mxu0 %v395
        %838 = vmatprep.subr.mxu0 %v390
        %839 = vmatpush1.msra.mxu0 %v389
        %840 = vmatprep.subr.mxu0 0.0
        %841 = vmatpush2.msra.mxu0 0.0
        %842 = vmatprep.subr.mxu0 0.0
        %843 = vmatpush2.msra.mxu0 0.0
        %844 = vmatprep.subr.mxu0 0.0
        %845 = vmatpush2.msra.mxu0 0.0
        %846 = vmatprep.subr.mxu0 0.0
        %847 = vmatpush2.msra.mxu0 0.0
        %848 = vmatprep.subr.mxu0 0.0
        %849 = vmatpush2.msra.mxu0 0.0
        %850 = vmatprep.subr.mxu0 0.0
        %851 = vmatpush2.msra.mxu0 0.0
        %852 = vmatprep.subr.mxu0 0.0
        %853 = vmatpush2.msra.mxu0 0.0
        %854 = vmatprep.subr.mxu0 0.0
        %855 = vmatpush2.msra.mxu0 0.0
        %856 = vmatprep.subr.mxu0 0.0
        %857 = vmatpush2.msra.mxu0 0.0
        %858 = vmatprep.subr.mxu0 0.0
        %859 = vmatpush2.msra.mxu0 0.0
        %860 = vmatprep.subr.mxu0 0.0
        %861 = vmatpush2.msra.mxu0 0.0
        %862 = vmatprep.subr.mxu0 0.0
        %863 = vmatpush2.msra.mxu0 0.0
        %864 = vmatprep.subr.mxu0 0.0
        %865 = vmatpush2.msra.mxu0 0.0
        %866 = vmatprep.subr.mxu0 0.0
        %867 = vmatpush2.msra.mxu0 0.0
        %868 = vmatprep.subr.mxu0 0.0
        %869 = vmatpush2.msra.mxu0 0.0
        %870 = vmatprep.subr.mxu0 0.0
        %871 = vmatpush2.msra.mxu0 0.0
        %872 = vmatprep.mubr.f32.mxu0 0.0
        %873 = vmatmul.mubr.f32.gmra.mxu0 %v664
        %v874 = vpop.f32.mrf.mxu0
        %v875 = vadd.f32 %v658, %v874
        %v876 = vpop.f32.mrf.mxu0
        %v877 = vadd.f32 %v660, %v876
        %878 = vdwg.mxu0
        %v879 = vld [vmem:[#allocation2] sm:$0xff]
        %v880 = vld [vmem:[#allocation2 + $0x8] sm:$0xff]
        %v881 = vld [vmem:[#allocation2 + $0x10] sm:$0xff]
        %v882 = vld [vmem:[#allocation2 + $0x18] sm:$0xff]
        %v883 = vld [vmem:[#allocation2 + $0x20] sm:$0xff]
        %v884 = vld [vmem:[#allocation2 + $0x28] sm:$0xff]
        %v885 = vadd.f32 %v733, %v879
        %v886 = vadd.f32 %v735, %v880
        %v887 = vadd.f32 %v804, %v881
        %v888 = vadd.f32 %v806, %v882
        %v889 = vadd.f32 %v875, %v883
        %v890 = vadd.f32 %v877, %v884
        %v891 = vadd.f32 %v885, %v886
        %v892 = vadd.f32 %v891, %v887
        %v893 = vadd.f32 %v892, %v888
        %v894 = vadd.f32 %v893, %v889
        %v895 = vadd.f32 %v894, %v890
        %896 = vadd.xlane.f32.xlu0 %v895
        %v897 = vpop.xlane.xlu0 %896
        %v898 = vrcp.pop 768.0
        %v899 = vmul.f32 %v897, %v898
        %v900 = vsub.f32 %v885, %v899
        %v901 = vsub.f32 %v886, %v899
        %v902 = vsub.f32 %v887, %v899
        %v903 = vsub.f32 %v888, %v899
        %v904 = vsub.f32 %v889, %v899
        %v905 = vsub.f32 %v890, %v899
        %v906 = vmul.f32 %v900, %v900
        %v907 = vmul.f32 %v901, %v901
        %v908 = vmul.f32 %v902, %v902
        %v909 = vmul.f32 %v903, %v903
        %v910 = vmul.f32 %v904, %v904
        %v911 = vmul.f32 %v905, %v905
        %v912 = vadd.f32 %v906, %v907
        %v913 = vadd.f32 %v912, %v908
        %v914 = vadd.f32 %v913, %v909
        %v915 = vadd.f32 %v914, %v910
        %v916 = vadd.f32 %v915, %v911
        %917 = vadd.xlane.f32.xlu0 %v916
        %v918 = vpop.xlane.xlu0 %917
        %v919 = vmul.f32 %v918, %v898
        %v920 = vadd.f32 %v919, 1e-12
        %v921 = vrsqrt.pop %v920
        %v922 = vmul.f32 %v900, %v921
        %v923 = vmul.f32 %v901, %v921
        %v924 = vmul.f32 %v902, %v921
        %v925 = vmul.f32 %v903, %v921
        %v926 = vmul.f32 %v904, %v921
        %v927 = vmul.f32 %v905, %v921
        %v928 = vld [vmem:[%s5] sm:$0x3f]
        %v930 = vlaneseq
        %v931 = vshrl.u32 %v930, 7
        %v932 = vsub.s32 0, %v931
        %v933 = vrot.slane %v928, %v932
        %v934 = vlaneseq
        %v935 = vshrl.u32 %v934, 7
        %v936 = vsub.s32 1, %v935
        %v937 = vrot.slane %v928, %v936
        %v938 = vlaneseq
        %v939 = vshrl.u32 %v938, 7
        %v940 = vsub.s32 2, %v939
        %v941 = vrot.slane %v928, %v940
        %v942 = vlaneseq
        %v943 = vshrl.u32 %v942, 7
        %v944 = vsub.s32 3, %v943
        %v945 = vrot.slane %v928, %v944
        %v946 = vlaneseq
        %v947 = vshrl.u32 %v946, 7
        %v948 = vsub.s32 4, %v947
        %v949 = vrot.slane %v928, %v948
        %v950 = vlaneseq
        %v951 = vshrl.u32 %v950, 7
        %v952 = vsub.s32 5, %v951
        %v953 = vrot.slane %v928, %v952
        %v960 = vmul.f32 %v922, %v933
        %v961 = vmul.f32 %v923, %v937
        %v962 = vmul.f32 %v924, %v941
        %v963 = vmul.f32 %v925, %v945
        %v964 = vmul.f32 %v926, %v949
        %v965 = vmul.f32 %v927, %v953
        %v966 = vld [vmem:[%s6] sm:$0x3f]
        %v968 = vlaneseq
        %v969 = vshrl.u32 %v968, 7
        %v970 = vsub.s32 0, %v969
        %v971 = vrot.slane %v966, %v970
        %v972 = vlaneseq
        %v973 = vshrl.u32 %v972, 7
        %v974 = vsub.s32 1, %v973
        %v975 = vrot.slane %v966, %v974
        %v976 = vlaneseq
        %v977 = vshrl.u32 %v976, 7
        %v978 = vsub.s32 2, %v977
        %v979 = vrot.slane %v966, %v978
        %v980 = vlaneseq
        %v981 = vshrl.u32 %v980, 7
        %v982 = vsub.s32 3, %v981
        %v983 = vrot.slane %v966, %v982
        %v984 = vlaneseq
        %v985 = vshrl.u32 %v984, 7
        %v986 = vsub.s32 4, %v985
        %v987 = vrot.slane %v966, %v986
        %v988 = vlaneseq
        %v989 = vshrl.u32 %v988, 7
        %v990 = vsub.s32 5, %v989
        %v991 = vrot.slane %v966, %v990
        %v998 = vadd.f32 %v960, %v971
        %v999 = vadd.f32 %v961, %v975
        %v1000 = vadd.f32 %v962, %v979
        %v1001 = vadd.f32 %v963, %v983
        %v1002 = vadd.f32 %v964, %v987
        %v1003 = vadd.f32 %v965, %v991
        %1004 = vst [vmem:[%s360] sm:$0xff] %v998
        %1005 = vst [vmem:[%s360 + $0x8] sm:$0xff] %v999
        %1006 = vst [vmem:[%s360 + $0x10] sm:$0xff] %v1000
        %1007 = vst [vmem:[%s360 + $0x18] sm:$0xff] %v1001
        %1008 = vst [vmem:[%s360 + $0x20] sm:$0xff] %v1002
        %1009 = vst [vmem:[%s360 + $0x28] sm:$0xff] %v1003
        %s1010 = sand.u32 %s211, 1
        %s1011 = scalar_lea.sflag [#allocation4], %s1010
        %s1012 = sand.u32 %s211, 1
        %s1013 = smul.addr %s1012, 48
        %s1014 = scalar_lea.vmem [#allocation8], %s1013
        // Predicated region
        $region61: #{tpu_custom_call.1} parent=47 // pred_check
          %p1015 = pneg %p221
        $region62: #{tpu_custom_call.1} parent=47 // pred_check_branch
          %1017 = sbr.rel (%p1015) target = $region64
        $region63: #{tpu_custom_call.1} parent=47 // pred_region
          %s1019 = ssub.s32 768, 768
          %1020 = vsyncadd %s1011, %s1019
          %s1021 = smul.addr %s28, 6
          %s1022 = smul.addr %s27, 6
          %s1023 = sadd.s32 %s1021, %s1022
          %s1024 = smul.addr %s1023, 128
          %s1025 = scalar_lea.hbm %s7, %s1024
          %s1027 = sshll.u32 %s1014, 4
          %s1028 = int_to_ptr.vmem [resolvable:$true] %s1027
          %1030 = dma.vmem_to_hbm [thread:$0]  %s1028, 768, %s1025, %s1011
        $region64: #{tpu_custom_call.1} parent=47 // pred_fallthru
          _
      $region48: #{tpu_custom_call.1} parent=5 // pred_fallthru
        _
      %p1031 = scmp.le.s32.totalorder 2, %s18
      // Predicated region
      $region65: #{tpu_custom_call.1} parent=5 // pred_check
        %p1032 = pneg %p1031
      $region66: #{tpu_custom_call.1} parent=5 // pred_check_branch
        %1034 = sbr.rel (%p1032) target = $region68
      $region67: #{tpu_custom_call.1} parent=5 // pred_region
        %s1035 = ssub.s32 %s18, 2
        // Predicated region
        $region69: #{tpu_custom_call.1} parent=67 // pred_check
          %p1036 = pneg %p227
        $region70: #{tpu_custom_call.1} parent=67 // pred_check_branch
          %1038 = sbr.rel (%p1036) target = $region72
        $region71: #{tpu_custom_call.1} parent=67 // pred_region
          %s1039 = sand.u32 %s212, 1
          %s1040 = scalar_lea.sflag [#allocation4], %s1039
          %s1041 = sand.u32 %s212, 1
          %s1042 = smul.addr %s1041, 48
          %s1043 = scalar_lea.vmem [#allocation8], %s1042
          %1044 = dma.done %s1040, 768
        $region72: #{tpu_custom_call.1} parent=67 // pred_fallthru
          _
      $region68: #{tpu_custom_call.1} parent=5 // pred_fallthru
        _
    $region6: #{tpu_custom_call.1} parent=1 // loop_footer
      %s22 = sadd.s32 1, %s18
    $region7: #{tpu_custom_call.1} parent=1 // loop_footer_branch
      %17 = sbr.rel target = $region3
    $region8: #{tpu_custom_call.1} parent=1 // loop_exit
      _
    %1045 = vsyncpa [#allocation3], 1
    %s1046 = scalar_lea.sflag [#allocation3], 1
    %1047 = vsyncpa %s1046, 1
    %1048 = vsyncpa [#allocation6], 1
    %1049 = vsyncpa [#allocation4], 1
    %s1050 = scalar_lea.sflag [#allocation4], 1
    %1051 = vsyncpa %s1050, 1

</llo_original>
